<compile_context>
chip_gen: v7x
topology: tpu7x:2x2x1
jax: 0.10.0
libtpu: 0.0.40
codegen_flags: <defaults>
</compile_context>

<pallas_src>
import functools

import jax
import jax.numpy as jnp
from jax import lax
from jax.experimental import pallas as pl
from jax.experimental.pallas import tpu as pltpu


def _round_up(x, m):
    return (x + m - 1) // m * m


def _ngram_kernel(context_size,
                  ids_ref,   # VMEM (TB, C)     int32 token ids
                  tbl_ref,   # VMEM (C, Vp, H)  bf16  fused emb @ W1 tables
                  b1_ref,    # VMEM (1, H)      f32
                  w2_ref,    # VMEM (H, Vp)     bf16
                  b2_ref,    # VMEM (1, Vp)     f32 (padded cols = -1e30)
                  out_ref):  # VMEM (TB, Vp)    f32 log-probs
    C = context_size
    TB, Vp = out_ref.shape
    H = w2_ref.shape[0]

    ids = ids_ref[...]                                        # (TB, C)
    vocab_iota = lax.broadcasted_iota(jnp.int32, (TB, Vp), 1)

    # Fused embedding lookup + linear1:  h_pre = sum_i onehot_i @ T[i].
    # The one-hot is exact in bf16, so the gather is exact; accumulation is
    # f32 on the MXU.  Out-of-range ids give an all-zero one-hot row
    # (bounds-safe, unlike an indexed VMEM read).
    h_pre = jnp.zeros((TB, H), jnp.float32)
    for i in range(C):
        tok = ids[:, i:i + 1]                                 # (TB, 1)
        onehot = (tok == vocab_iota).astype(tbl_ref.dtype)    # (TB, Vp) bf16
        h_pre = h_pre + jnp.dot(onehot, tbl_ref[i],
                                preferred_element_type=jnp.float32)

    # Bias + ReLU in f32 (v5e VPU has no bf16 path).
    h = jnp.maximum(h_pre + b1_ref[...], 0.0)                 # (TB, H) f32

    # linear2 on the MXU in bf16, f32 accumulation.  The padded-vocab mask is
    # already folded into b2 (-1e30 on padded columns, zero W2 columns).
    logits = jnp.dot(h.astype(w2_ref.dtype), w2_ref[...],
                     preferred_element_type=jnp.float32)
    logits = logits + b2_ref[...]                             # (TB, Vp) f32

    # log_softmax over the vocab axis (max-stabilised); padded columns give
    # exp(-huge) == 0 so they do not perturb the result.
    m = jnp.max(logits, axis=1, keepdims=True)
    z = logits - m
    lse = jnp.log(jnp.sum(jnp.exp(z), axis=1, keepdims=True))
    out_ref[...] = z - lse


def ngram_forward_batched(ids, emb, w1, b1, w2, b2, *,
                          block_b=512, mxu_dtype=jnp.bfloat16):
    """Batched NGram forward: ids (B, C) int -> (B, V) float32 log-probs."""
    ids = jnp.asarray(ids, jnp.int32)
    B, C = ids.shape
    V, D = emb.shape
    H = w1.shape[1]
    assert w1.shape == (C * D, H), (w1.shape, (C * D, H))

    b1 = jnp.reshape(b1, (1, H)).astype(jnp.float32)
    b2 = jnp.reshape(b2, (1, V)).astype(jnp.float32)

    # Lane-dense vocab padding.
    Vp = _round_up(V, 128)

    # Batch tile: as large as possible (amortize per-step overhead), but split
    # into >= 2 grid steps when the batch allows it so both v7x TensorCores
    # get work under dimension_semantics=("parallel",).
    tb = min(block_b, _round_up(B, 8))
    if B > 8 and _round_up(B, tb) // tb < 2:
        tb = _round_up(pl.cdiv(B, 2), 8)
    Bp = _round_up(B, tb)

    # Fused per-position tables: T[c] = emb @ W1[c*D:(c+1)*D]  -> (C, V, H).
    w1_r = w1.astype(jnp.float32).reshape(C, D, H)
    tbl = jnp.einsum("vd,cdh->cvh", emb.astype(jnp.float32), w1_r)
    tbl_p = jnp.zeros((C, Vp, H), mxu_dtype).at[:, :V, :].set(
        tbl.astype(mxu_dtype))

    # W2 padded with zero columns; the mask is folded into b2 (-1e30 pads).
    w2_p = jnp.zeros((H, Vp), mxu_dtype).at[:, :V].set(w2.astype(mxu_dtype))
    b2_p = jnp.full((1, Vp), -1e30, jnp.float32).at[:, :V].set(b2)
    ids_p = jnp.zeros((Bp, C), jnp.int32).at[:B, :].set(ids)

    # VMEM budget: resident weights + double-buffered per-step tiles, with
    # headroom, capped at v7x's 64 MiB physical VMEM.
    wbytes = jnp.dtype(mxu_dtype).itemsize
    resident = (C * Vp * H + H * Vp) * wbytes + (H + Vp) * 4
    per_step = tb * C * 4 + tb * Vp * 4
    vmem_bytes = 2 * (resident + per_step) + (2 << 20)
    vmem_bytes = int(min(max(vmem_bytes, 32 << 20), 64 << 20))

    kernel = functools.partial(_ngram_kernel, C)

    out = pl.pallas_call(
        kernel,
        out_shape=jax.ShapeDtypeStruct((Bp, Vp), jnp.float32),
        grid=(Bp // tb,),
        in_specs=[
            pl.BlockSpec((tb, C), lambda b: (b, 0)),        # ids (batch-tiled)
            pl.BlockSpec((C, Vp, H), lambda b: (0, 0, 0)),  # fused tables
            pl.BlockSpec((1, H), lambda b: (0, 0)),         # b1
            pl.BlockSpec((H, Vp), lambda b: (0, 0)),        # W2
            pl.BlockSpec((1, Vp), lambda b: (0, 0)),        # b2 (+mask fold)
        ],
        out_specs=pl.BlockSpec((tb, Vp), lambda b: (b, 0)),
        compiler_params=pltpu.CompilerParams(
            dimension_semantics=("parallel",),
            vmem_limit_bytes=vmem_bytes),
    )(ids_p, tbl_p, b1, w2_p, b2_p)

    return out[:B, :V]


def ngram_forward(ids, emb, w1, b1, w2, b2):
    """Exact analogue of NGramLanguageModeler.forward: (C,) ids -> (1, V)."""
    return ngram_forward_batched(jnp.reshape(ids, (1, -1)), emb, w1, b1, w2, b2)


def ngram_reference_batched(ids, emb, w1, b1, w2, b2):
    B = ids.shape[0]
    embeds = emb[ids].reshape(B, -1)
    h = jnp.maximum(embeds @ w1 + b1.reshape(1, -1), 0.0)
    logits = h @ w2 + b2.reshape(1, -1)
    return jax.nn.log_softmax(logits, axis=1)


if __name__ == "__main__":
    vocab_size = 50
    embedding_dim = 16
    context_size = 2
    hidden = 128
    batch = 16

    key = jax.random.PRNGKey(0)
    k_emb, k_w1, k_b1, k_w2, k_b2, k_ids = jax.random.split(key, 6)

    emb = jax.random.normal(k_emb, (vocab_size, embedding_dim), jnp.float32) * 0.1
    w1 = jax.random.normal(k_w1, (context_size * embedding_dim, hidden), jnp.float32) * 0.1
    b1 = jax.random.normal(k_b1, (1, hidden), jnp.float32) * 0.1
    w2 = jax.random.normal(k_w2, (hidden, vocab_size), jnp.float32) * 0.1
    b2 = jax.random.normal(k_b2, (1, vocab_size), jnp.float32) * 0.1

    ids_batch = jax.random.randint(
        k_ids, (batch, context_size), 0, vocab_size, jnp.int32)

    # bf16 MXU operands with f32 accumulation drift slightly vs the f32
    # reference, so the tolerance is looser than the previous all-f32 version.
    ATOL, RTOL = 2e-2, 1e-3

    # Batched path (2 grid steps here -> both v7x TensorCores are used).
    out_batch = jax.block_until_ready(
        ngram_forward_batched(ids_batch, emb, w1, b1, w2, b2))
    assert out_batch.shape == (batch, vocab_size)

    ref_batch = ngram_reference_batched(ids_batch, emb, w1, b1, w2, b2)
    err_b = jnp.max(jnp.abs(out_batch - ref_batch))
    assert jnp.allclose(out_batch, ref_batch, atol=ATOL, rtol=RTOL), (
        f"batched max abs err {err_b}")

    # Single-context path, matching NGramLanguageModeler.forward exactly.
    ids_single = ids_batch[0]
    out_single = jax.block_until_ready(
        ngram_forward(ids_single, emb, w1, b1, w2, b2))
    ref_single = ngram_reference_batched(
        ids_single.reshape(1, -1), emb, w1, b1, w2, b2)
    assert out_single.shape == (1, vocab_size)
    err_s = jnp.max(jnp.abs(out_single - ref_single))
    assert jnp.allclose(out_single, ref_single, atol=ATOL, rtol=RTOL), (
        f"single max abs err {err_s}")

    print("KERNEL_OK")
</pallas_src>

<mosaic_0001>
module attributes {stable_mosaic.version = 11 : i64} {
  func.func @_ngram_kernel(%arg0: i32, %arg1: memref<8x2xi32, #tpu.memory_space<vmem>>, %arg2: memref<2x128x128xbf16, #tpu.memory_space<vmem>>, %arg3: memref<1x128xf32, #tpu.memory_space<vmem>>, %arg4: memref<128x128xbf16, #tpu.memory_space<vmem>>, %arg5: memref<1x128xf32, #tpu.memory_space<vmem>>, %arg6: memref<8x128xf32, #tpu.memory_space<vmem>>) attributes {dimension_semantics = [#tpu.dimension_semantics<parallel>], iteration_bounds = array<i64: 2>, scalar_prefetch = 0 : i64, scratch_operands = 0 : i64, tpu.core_type = #tpu.core_type<tc>, window_params = [{transform_indices = @transform_0, window_bounds = array<i64: 8, 2>}, {pipeline_mode = #tpu.pipeline_mode<synchronous>, transform_indices = @transform_1, window_bounds = array<i64: 2, 128, 128>}, {pipeline_mode = #tpu.pipeline_mode<synchronous>, transform_indices = @transform_2, window_bounds = array<i64: 1, 128>}, {pipeline_mode = #tpu.pipeline_mode<synchronous>, transform_indices = @transform_3, window_bounds = array<i64: 128, 128>}, {pipeline_mode = #tpu.pipeline_mode<synchronous>, transform_indices = @transform_4, window_bounds = array<i64: 1, 128>}, {transform_indices = @transform_5, window_bounds = array<i64: 8, 128>}]} {
    %c0 = arith.constant 0 : index
    %c0_0 = arith.constant 0 : index
    %0 = vector.load %arg1[%c0, %c0_0] : memref<8x2xi32, #tpu.memory_space<vmem>>, vector<8x2xi32>
    %1 = tpu.iota {dimensions = array<i32: 1>} : vector<8x128xi32>
    %cst = arith.constant 0.000000e+00 : f32
    %2 = vector.broadcast %cst : f32 to vector<8x128xf32>
    %3 = vector.extract_strided_slice %0 {offsets = [0, 0], sizes = [8, 1], strides = [1, 1]} : vector<8x2xi32> to vector<8x1xi32>
    %4 = vector.broadcast %3 : vector<8x1xi32> to vector<8x128xi32>
    %5 = arith.cmpi eq, %4, %1 : vector<8x128xi32>
    %6 = arith.extui %5 : vector<8x128xi1> to vector<8x128xi32>
    %7 = arith.sitofp %6 : vector<8x128xi32> to vector<8x128xf32>
    %8 = arith.truncf %7 : vector<8x128xf32> to vector<8x128xbf16>
    %c0_1 = arith.constant 0 : index
    %c0_2 = arith.constant 0 : index
    %c0_3 = arith.constant 0 : index
    %9 = vector.load %arg2[%c0_1, %c0_2, %c0_3] : memref<2x128x128xbf16, #tpu.memory_space<vmem>>, vector<1x128x128xbf16>
    %10 = vector.shape_cast %9 : vector<1x128x128xbf16> to vector<128x128xbf16>
    %cst_4 = arith.constant dense<0.000000e+00> : vector<8x128xf32>
    %11 = tpu.matmul %8, %10, %cst_4 {dimension_numbers = #tpu.dot_dimension_numbers<[1], [0], [0], [1], [0, 0, 1, 1], [], []>} : vector<8x128xbf16>, vector<128x128xbf16>, vector<8x128xf32> -> vector<8x128xf32>
    %12 = arith.addf %2, %11 : vector<8x128xf32>
    %13 = vector.extract_strided_slice %0 {offsets = [0, 1], sizes = [8, 1], strides = [1, 1]} : vector<8x2xi32> to vector<8x1xi32>
    %14 = vector.broadcast %13 : vector<8x1xi32> to vector<8x128xi32>
    %15 = arith.cmpi eq, %14, %1 : vector<8x128xi32>
    %16 = arith.extui %15 : vector<8x128xi1> to vector<8x128xi32>
    %17 = arith.sitofp %16 : vector<8x128xi32> to vector<8x128xf32>
    %18 = arith.truncf %17 : vector<8x128xf32> to vector<8x128xbf16>
    %c1 = arith.constant 1 : index
    %c0_5 = arith.constant 0 : index
    %c0_6 = arith.constant 0 : index
    %19 = vector.load %arg2[%c1, %c0_5, %c0_6] : memref<2x128x128xbf16, #tpu.memory_space<vmem>>, vector<1x128x128xbf16>
    %20 = vector.shape_cast %19 : vector<1x128x128xbf16> to vector<128x128xbf16>
    %cst_7 = arith.constant dense<0.000000e+00> : vector<8x128xf32>
    %21 = tpu.matmul %18, %20, %cst_7 {dimension_numbers = #tpu.dot_dimension_numbers<[1], [0], [0], [1], [0, 0, 1, 1], [], []>} : vector<8x128xbf16>, vector<128x128xbf16>, vector<8x128xf32> -> vector<8x128xf32>
    %22 = arith.addf %12, %21 : vector<8x128xf32>
    %c0_8 = arith.constant 0 : index
    %c0_9 = arith.constant 0 : index
    %23 = vector.load %arg3[%c0_8, %c0_9] : memref<1x128xf32, #tpu.memory_space<vmem>>, vector<1x128xf32>
    %24 = vector.broadcast %23 : vector<1x128xf32> to vector<8x128xf32>
    %25 = arith.addf %22, %24 : vector<8x128xf32>
    %cst_10 = arith.constant 0.000000e+00 : f32
    %26 = vector.broadcast %cst_10 : f32 to vector<8x128xf32>
    %27 = arith.maximumf %25, %26 : vector<8x128xf32>
    %28 = arith.truncf %27 : vector<8x128xf32> to vector<8x128xbf16>
    %c0_11 = arith.constant 0 : index
    %c0_12 = arith.constant 0 : index
    %29 = vector.load %arg4[%c0_11, %c0_12] : memref<128x128xbf16, #tpu.memory_space<vmem>>, vector<128x128xbf16>
    %cst_13 = arith.constant dense<0.000000e+00> : vector<8x128xf32>
    %30 = tpu.matmul %28, %29, %cst_13 {dimension_numbers = #tpu.dot_dimension_numbers<[1], [0], [0], [1], [0, 0, 1, 1], [], []>} : vector<8x128xbf16>, vector<128x128xbf16>, vector<8x128xf32> -> vector<8x128xf32>
    %c0_14 = arith.constant 0 : index
    %c0_15 = arith.constant 0 : index
    %31 = vector.load %arg5[%c0_14, %c0_15] : memref<1x128xf32, #tpu.memory_space<vmem>>, vector<1x128xf32>
    %32 = vector.broadcast %31 : vector<1x128xf32> to vector<8x128xf32>
    %33 = arith.addf %30, %32 : vector<8x128xf32>
    %cst_16 = arith.constant dense<0xFF800000> : vector<8xf32>
    %34 = vector.multi_reduction <maximumf>, %33, %cst_16 [1] : vector<8x128xf32> to vector<8xf32>
    %35 = vector.shape_cast %34 : vector<8xf32> to vector<8x1xf32>
    %36 = vector.broadcast %35 : vector<8x1xf32> to vector<8x128xf32>
    %37 = arith.subf %33, %36 : vector<8x128xf32>
    %38 = math.exp %37 : vector<8x128xf32>
    %cst_17 = arith.constant dense<0.000000e+00> : vector<8xf32>
    %39 = vector.multi_reduction <add>, %38, %cst_17 [1] : vector<8x128xf32> to vector<8xf32>
    %40 = vector.shape_cast %39 : vector<8xf32> to vector<8x1xf32>
    %41 = math.log %40 : vector<8x1xf32>
    %42 = vector.broadcast %41 : vector<8x1xf32> to vector<8x128xf32>
    %43 = arith.subf %37, %42 : vector<8x128xf32>
    %c0_18 = arith.constant 0 : index
    %c0_19 = arith.constant 0 : index
    %44 = vector.load %arg6[%c0_18, %c0_19] : memref<8x128xf32, #tpu.memory_space<vmem>>, vector<8x128xf32>
    tpu.vector_store %arg6[%c0_18, %c0_19], %43 {strides = array<i32>} : memref<8x128xf32, #tpu.memory_space<vmem>>, vector<8x128xf32>,
    return
  }
  func.func @transform_0(%arg0: i32) -> (i32, i32) {
    %c0_i32 = arith.constant 0 : i32
    %c0_i32_0 = arith.constant 0 : i32
    return %arg0, %c0_i32 : i32, i32
  }
  func.func @transform_1(%arg0: i32) -> (i32, i32, i32) {
    %c0_i32 = arith.constant 0 : i32
    %c0_i32_0 = arith.constant 0 : i32
    %c0_i32_1 = arith.constant 0 : i32
    %c0_i32_2 = arith.constant 0 : i32
    return %c0_i32, %c0_i32_0, %c0_i32_1 : i32, i32, i32
  }
  func.func @transform_2(%arg0: i32) -> (i32, i32) {
    %c0_i32 = arith.constant 0 : i32
    %c0_i32_0 = arith.constant 0 : i32
    %c0_i32_1 = arith.constant 0 : i32
    return %c0_i32, %c0_i32_0 : i32, i32
  }
  func.func @transform_3(%arg0: i32) -> (i32, i32) {
    %c0_i32 = arith.constant 0 : i32
    %c0_i32_0 = arith.constant 0 : i32
    %c0_i32_1 = arith.constant 0 : i32
    return %c0_i32, %c0_i32_0 : i32, i32
  }
  func.func @transform_4(%arg0: i32) -> (i32, i32) {
    %c0_i32 = arith.constant 0 : i32
    %c0_i32_0 = arith.constant 0 : i32
    %c0_i32_1 = arith.constant 0 : i32
    return %c0_i32, %c0_i32_0 : i32, i32
  }
  func.func @transform_5(%arg0: i32) -> (i32, i32) {
    %c0_i32 = arith.constant 0 : i32
    %c0_i32_0 = arith.constant 0 : i32
    return %arg0, %c0_i32 : i32, i32
  }
}

</mosaic_0001>

<llo_original>
// kernel: tpu_custom_call.1
$region0: #{tpu_custom_call.1}
  #allocation0 [shape = 'u32[]', space=smem, size = 0x4, offset = 0x4, fixed_abs, tag = 'smem constant byte address 0x4 - core index']
  #allocation1 [shape = 'u32[144,128]{1,0:T(1,128)}', space=vmem, size = 0x12000, scoped, tag = 'internal scratch']
  %s0 = inlined_call_operand.vmem [shape: s32[16,2], index: 0, kind: input, shape index: {}]
  %s1 = inlined_call_operand.hbm [shape: bf16[2,128,128], index: 1, kind: input, shape index: {}]
  %s2 = inlined_call_operand.vmem [shape: f32[1,128], index: 2, kind: input, shape index: {}]
  %s3 = inlined_call_operand.hbm [shape: bf16[128,128], index: 3, kind: input, shape index: {}]
  %s4 = inlined_call_operand.vmem [shape: f32[1,128], index: 4, kind: input, shape index: {}]
  %s5 = inlined_call_operand.hbm [shape: f32[16,128], index: 5, kind: output, shape index: {}]
  %s6 = sld [smem:[#allocation0]]
  $region61: #{tpu_custom_call.1} parent=0
    _
  %s8 = ssub.s32 1, %s6
  %s9 = scalar_select 0, %s8, %s6
  $region1: #{tpu_custom_call.1} parent=0
    #allocation2 [shape = 'u8[65536]{0}', space=vmem, size = 0x10000, scoped, tag = 'input window, operand 1, single buffered']
    #allocation3 [shape = 's32[2]{0}', space=sflag, size = 0x8, scoped, tag = 'scoped memory for tpu_custom_call.1']
    #allocation4 [shape = 's32[2]{0}', space=sflag, size = 0x8, scoped, tag = 'scoped memory for tpu_custom_call.1']
    #allocation5 [shape = 'u8[32768]{0}', space=vmem, size = 0x8000, scoped, tag = 'input window, operand 3, single buffered']
    #allocation6 [shape = 's32[1]{0}', space=sflag, size = 0x4, scoped, tag = 'scoped memory for tpu_custom_call.1']
    #allocation7 [shape = 'u8[8192]{0}', space=vmem, size = 0x2000, scoped, tag = 'output window, operand 0']
    %10 = vsyncpa [#allocation3], 0
    %11 = vsyncpa [#allocation6], 0
    %12 = vsyncpa [#allocation4], 0
    %s13 = scalar_lea.sflag [#allocation4], 1
    %14 = vsyncpa %s13, 0
    loop: start=0, step=1, limit=4
    $region2: #{tpu_custom_call.1} parent=1 // loop_pre_header
      _
    $region3: #{tpu_custom_call.1} parent=1 // loop_header
      %s16 = sphi 0, %s20
      %p17 = scmp.ge.s32.totalorder %s16, 4
      %s26 = sphi 0, %s28
      %s29 = sphi 0, %s26
      %s30 = sphi 0, %s29
      %s46 = sphi 0, %s30
      %s50 = sphi 0, %s50
      %s52 = sphi 0, %s50
      %s53 = sphi 0, %s52
      %s67 = sphi 0, %s53
      %s71 = sphi 0, %s71
      %s73 = sphi 0, %s71
      %s74 = sphi 0, %s73
      %s88 = sphi 0, %s74
      %s92 = sphi 0, %s92
      %s94 = sphi 0, %s92
      %s95 = sphi 0, %s94
      %s109 = sphi 0, %s95
      %s113 = sphi 0, %s113
      %s115 = sphi 0, %s113
      %s116 = sphi 0, %s115
      %s130 = sphi 0, %s116
      %s136 = sphi 0, %s138
      %s139 = sphi 0, %s136
      %s140 = sphi 0, %s139
      %s156 = sphi 0, %s140
    $region4: #{tpu_custom_call.1} parent=1 // loop_header_branch
      %19 = sbr.rel (%p17) target = $region8
    $region5: #{tpu_custom_call.1} parent=1 // loop_body
      %s21 = ssub.s32 %s16, 1
      %s22 = ssub.s32 %s16, 2
      %s23 = sadd.s32 %s16, 1
      %s24 = ssub.s32 %s16, %s23
      %p25 = scmp.eq.s32.totalorder %s24, 0
      %s27 = sadd.s32 %s26, 1
      %s28 = scalar_select %p25, %s26, %s27
      %p31 = pneg %p25
      %p32 = scmp.eq.s32.totalorder %s16, 1
      %p33 = por %p31, %p32
      %p34 = scmp.ne.s32.totalorder %s26, %s29
      %p35 = scmp.eq.s32.totalorder %s16, 0
      %p36 = por %p34, %p35
      %p37 = scmp.ne.s32.totalorder %s26, %s29
      %p38 = scmp.eq.s32.totalorder %s21, 1
      %p39 = por %p37, %p38
      %p40 = scmp.ne.s32.totalorder %s29, %s30
      %p41 = scmp.eq.s32.totalorder %s21, 0
      %p42 = por %p40, %p41
      %p43 = scmp.ne.s32.totalorder %s29, %s30
      %p44 = scmp.eq.s32.totalorder %s22, 1
      %p45 = por %p43, %p44
      %p47 = scmp.ne.s32.totalorder %s30, %s46
      %p48 = scmp.eq.s32.totalorder %s22, 0
      %p49 = por %p47, %p48
      %s51 = sadd.s32 %s50, 1
      %p54 = scmp.eq.s32.totalorder %s16, 1
      %p55 = scmp.ne.s32.totalorder %s50, %s52
      %p56 = scmp.eq.s32.totalorder %s16, 0
      %p57 = por %p55, %p56
      %p58 = scmp.ne.s32.totalorder %s50, %s52
      %p59 = scmp.eq.s32.totalorder %s21, 1
      %p60 = por %p58, %p59
      %p61 = scmp.ne.s32.totalorder %s52, %s53
      %p62 = scmp.eq.s32.totalorder %s21, 0
      %p63 = por %p61, %p62
      %p64 = scmp.ne.s32.totalorder %s52, %s53
      %p65 = scmp.eq.s32.totalorder %s22, 1
      %p66 = por %p64, %p65
      %p68 = scmp.ne.s32.totalorder %s53, %s67
      %p69 = scmp.eq.s32.totalorder %s22, 0
      %p70 = por %p68, %p69
      %s72 = sadd.s32 %s71, 1
      %p75 = scmp.eq.s32.totalorder %s16, 1
      %p76 = scmp.ne.s32.totalorder %s71, %s73
      %p77 = scmp.eq.s32.totalorder %s16, 0
      %p78 = por %p76, %p77
      %p79 = scmp.ne.s32.totalorder %s71, %s73
      %p80 = scmp.eq.s32.totalorder %s21, 1
      %p81 = por %p79, %p80
      %p82 = scmp.ne.s32.totalorder %s73, %s74
      %p83 = scmp.eq.s32.totalorder %s21, 0
      %p84 = por %p82, %p83
      %p85 = scmp.ne.s32.totalorder %s73, %s74
      %p86 = scmp.eq.s32.totalorder %s22, 1
      %p87 = por %p85, %p86
      %p89 = scmp.ne.s32.totalorder %s74, %s88
      %p90 = scmp.eq.s32.totalorder %s22, 0
      %p91 = por %p89, %p90
      %s93 = sadd.s32 %s92, 1
      %p96 = scmp.eq.s32.totalorder %s16, 1
      %p97 = scmp.ne.s32.totalorder %s92, %s94
      %p98 = scmp.eq.s32.totalorder %s16, 0
      %p99 = por %p97, %p98
      %p100 = scmp.ne.s32.totalorder %s92, %s94
      %p101 = scmp.eq.s32.totalorder %s21, 1
      %p102 = por %p100, %p101
      %p103 = scmp.ne.s32.totalorder %s94, %s95
      %p104 = scmp.eq.s32.totalorder %s21, 0
      %p105 = por %p103, %p104
      %p106 = scmp.ne.s32.totalorder %s94, %s95
      %p107 = scmp.eq.s32.totalorder %s22, 1
      %p108 = por %p106, %p107
      %p110 = scmp.ne.s32.totalorder %s95, %s109
      %p111 = scmp.eq.s32.totalorder %s22, 0
      %p112 = por %p110, %p111
      %s114 = sadd.s32 %s113, 1
      %p117 = scmp.eq.s32.totalorder %s16, 1
      %p118 = scmp.ne.s32.totalorder %s113, %s115
      %p119 = scmp.eq.s32.totalorder %s16, 0
      %p120 = por %p118, %p119
      %p121 = scmp.ne.s32.totalorder %s113, %s115
      %p122 = scmp.eq.s32.totalorder %s21, 1
      %p123 = por %p121, %p122
      %p124 = scmp.ne.s32.totalorder %s115, %s116
      %p125 = scmp.eq.s32.totalorder %s21, 0
      %p126 = por %p124, %p125
      %p127 = scmp.ne.s32.totalorder %s115, %s116
      %p128 = scmp.eq.s32.totalorder %s22, 1
      %p129 = por %p127, %p128
      %p131 = scmp.ne.s32.totalorder %s116, %s130
      %p132 = scmp.eq.s32.totalorder %s22, 0
      %p133 = por %p131, %p132
      %s134 = ssub.s32 %s16, %s23
      %p135 = scmp.eq.s32.totalorder %s134, 0
      %s137 = sadd.s32 %s136, 1
      %s138 = scalar_select %p135, %s136, %s137
      %p141 = pneg %p135
      %p142 = scmp.eq.s32.totalorder %s16, 1
      %p143 = por %p141, %p142
      %p144 = scmp.ne.s32.totalorder %s136, %s139
      %p145 = scmp.eq.s32.totalorder %s16, 0
      %p146 = por %p144, %p145
      %p147 = scmp.ne.s32.totalorder %s136, %s139
      %p148 = scmp.eq.s32.totalorder %s21, 1
      %p149 = por %p147, %p148
      %p150 = scmp.ne.s32.totalorder %s139, %s140
      %p151 = scmp.eq.s32.totalorder %s21, 0
      %p152 = por %p150, %p151
      %p153 = scmp.ne.s32.totalorder %s139, %s140
      %p154 = scmp.eq.s32.totalorder %s22, 1
      %p155 = por %p153, %p154
      %p157 = scmp.ne.s32.totalorder %s140, %s156
      %p158 = scmp.eq.s32.totalorder %s22, 0
      %p159 = por %p157, %p158
      %p160 = scmp.le.s32.totalorder 1, %s16
      %p161 = scmp.lt.s32.totalorder %s16, 3
      %p162 = pnand %p160, %p161
      %p163 = pneg %p162
      // Predicated region
      $region9: #{tpu_custom_call.1} parent=5 // pred_check
        _
      $region10: #{tpu_custom_call.1} parent=5 // pred_check_branch
        %165 = sbr.rel (%p162) target = $region12
      $region11: #{tpu_custom_call.1} parent=5 // pred_region
        %s166 = ssub.s32 %s16, 1
        // Predicated region
        $region13: #{tpu_custom_call.1} parent=11 // pred_check
          %p167 = pneg %p63
        $region14: #{tpu_custom_call.1} parent=11 // pred_check_branch
          %169 = sbr.rel (%p167) target = $region16
        $region15: #{tpu_custom_call.1} parent=11 // pred_region
          %s171 = ssub.s32 2048, 2048
          %172 = vsyncadd [#allocation3], %s171
          %s173 = sshll.u32 [#allocation2], 4
          %s174 = int_to_ptr.vmem [resolvable:$true] %s173
          %179 = dma.hbm_to_vmem [thread:$0]  %s1, 2048, %s174, [#allocation3], 64, 64, 4
        $region16: #{tpu_custom_call.1} parent=11 // pred_fallthru
          _
        // Predicated region
        $region17: #{tpu_custom_call.1} parent=11 // pred_check
          %p180 = pneg %p84
        $region18: #{tpu_custom_call.1} parent=11 // pred_check_branch
          %182 = sbr.rel (%p180) target = $region20
        $region19: #{tpu_custom_call.1} parent=11 // pred_region
          _
        $region20: #{tpu_custom_call.1} parent=11 // pred_fallthru
          _
        // Predicated region
        $region21: #{tpu_custom_call.1} parent=11 // pred_check
          %p183 = pneg %p105
        $region22: #{tpu_custom_call.1} parent=11 // pred_check_branch
          %185 = sbr.rel (%p183) target = $region24
        $region23: #{tpu_custom_call.1} parent=11 // pred_region
          %s187 = ssub.s32 1024, 1024
          %188 = vsyncadd [#allocation6], %s187
          %s189 = sshll.u32 [#allocation5], 4
          %s190 = int_to_ptr.vmem [resolvable:$true] %s189
          %195 = dma.hbm_to_vmem [thread:$0]  %s3, 1024, %s190, [#allocation6], 64, 64, 4
        $region24: #{tpu_custom_call.1} parent=11 // pred_fallthru
          _
        // Predicated region
        $region25: #{tpu_custom_call.1} parent=11 // pred_check
          %p196 = pneg %p126
        $region26: #{tpu_custom_call.1} parent=11 // pred_check_branch
          %198 = sbr.rel (%p196) target = $region28
        $region27: #{tpu_custom_call.1} parent=11 // pred_region
          _
        $region28: #{tpu_custom_call.1} parent=11 // pred_fallthru
          _
      $region12: #{tpu_custom_call.1} parent=5 // pred_fallthru
        _
      %p199 = scmp.lt.s32.totalorder %s16, 2
      // Predicated region
      $region29: #{tpu_custom_call.1} parent=5 // pred_check
        %p200 = pneg %p199
      $region30: #{tpu_custom_call.1} parent=5 // pred_check_branch
        %202 = sbr.rel (%p200) target = $region32
      $region31: #{tpu_custom_call.1} parent=5 // pred_region
        // Predicated region
        $region33: #{tpu_custom_call.1} parent=31 // pred_check
          %p203 = pneg %p36
        $region34: #{tpu_custom_call.1} parent=31 // pred_check_branch
          %205 = sbr.rel (%p203) target = $region36
        $region35: #{tpu_custom_call.1} parent=31 // pred_region
          %p206 = scmp.lt.s32.totalorder %s16, 1
          %s207 = scalar_select %p206, %s16, 1
          %s208 = smul.addr %s207, 8
          %s209 = scalar_lea.vmem %s0, %s208
        $region36: #{tpu_custom_call.1} parent=31 // pred_fallthru
          _
      $region32: #{tpu_custom_call.1} parent=5 // pred_fallthru
        _
      %p210 = scmp.le.s32.totalorder 1, %s16
      %p211 = scmp.lt.s32.totalorder %s16, 3
      %p212 = pnand %p210, %p211
      %p213 = pneg %p212
      // Predicated region
      $region37: #{tpu_custom_call.1} parent=5 // pred_check
        _
      $region38: #{tpu_custom_call.1} parent=5 // pred_check_branch
        %215 = sbr.rel (%p212) target = $region40
      $region39: #{tpu_custom_call.1} parent=5 // pred_region
        %s216 = ssub.s32 %s16, 1
        // Predicated region
        $region41: #{tpu_custom_call.1} parent=39 // pred_check
          %p217 = pneg %p63
        $region42: #{tpu_custom_call.1} parent=39 // pred_check_branch
          %219 = sbr.rel (%p217) target = $region44
        $region43: #{tpu_custom_call.1} parent=39 // pred_region
          %220 = dma.done [#allocation3], 2048
        $region44: #{tpu_custom_call.1} parent=39 // pred_fallthru
          _
        // Predicated region
        $region45: #{tpu_custom_call.1} parent=39 // pred_check
          %p221 = pneg %p105
        $region46: #{tpu_custom_call.1} parent=39 // pred_check_branch
          %223 = sbr.rel (%p221) target = $region48
        $region47: #{tpu_custom_call.1} parent=39 // pred_region
          %224 = dma.done [#allocation6], 1024
        $region48: #{tpu_custom_call.1} parent=39 // pred_fallthru
          _
        %p225 = scmp.lt.s32.totalorder %s21, 1
        %s226 = scalar_select %p225, %s21, 1
        %s227 = smul.addr %s226, 8
        %s228 = scalar_lea.vmem %s0, %s227
        %p229 = pneg %p42
        %p230 = pneg %p39
        %p231 = pneg %p63
        %p232 = pneg %p60
        %p233 = pneg %p84
        %p234 = pneg %p81
        %p235 = pneg %p105
        %p236 = pneg %p102
        %p237 = pneg %p126
        %p238 = pneg %p123
        %p239 = pneg %p152
        %p240 = pneg %p149
        %s241 = sand.u32 %s139, 1
        %s242 = scalar_lea.sflag [#allocation4], %s241
        %s243 = sand.u32 %s139, 1
        %s244 = smul.addr %s243, 8
        %s245 = scalar_lea.vmem [#allocation7], %s244
        %p246 = scmp.lt.s32.totalorder %s21, 1
        %s247 = scalar_select %p246, %s21, 1
        %s248 = smul.addr %s247, 8
        %s249 = scalar_lea.vmem %s0, %s248
        %v251 = vld [vmem:[%s249] sm:$0xff]
        %v252 = vlaneseq
        %v253 = vand.u32 %v252, 127
        %254 = vset.pattern.permute.xlu0 0
        %255 = vperm.xlu0 %254, %v251
        %v256 = vpop.permute.xlu0 %255
        %vm257 = vcmp.eq.s32.totalorder %v256, %v253
        %v258 = vsel %vm257, 1, 0
        %v259 = vcvt.s32.f32 %v258
        %v260 = vpack.c.bf16 %v259, %v259
        %v261 = vld [vmem:[#allocation2] sm:$0xf]
        %v262 = vld [vmem:[#allocation2 + $0x4] sm:$0xf]
        %v263 = vld [vmem:[#allocation2 + $0x8] sm:$0xf]
        %v264 = vld [vmem:[#allocation2 + $0xc] sm:$0xf]
        %v265 = vld [vmem:[#allocation2 + $0x10] sm:$0xf]
        %v266 = vld [vmem:[#allocation2 + $0x14] sm:$0xf]
        %v267 = vld [vmem:[#allocation2 + $0x18] sm:$0xf]
        %v268 = vld [vmem:[#allocation2 + $0x1c] sm:$0xf]
        %v269 = vld [vmem:[#allocation2 + $0x20] sm:$0xf]
        %v270 = vld [vmem:[#allocation2 + $0x24] sm:$0xf]
        %v271 = vld [vmem:[#allocation2 + $0x28] sm:$0xf]
        %v272 = vld [vmem:[#allocation2 + $0x2c] sm:$0xf]
        %v273 = vld [vmem:[#allocation2 + $0x30] sm:$0xf]
        %v274 = vld [vmem:[#allocation2 + $0x34] sm:$0xf]
        %v275 = vld [vmem:[#allocation2 + $0x38] sm:$0xf]
        %v276 = vld [vmem:[#allocation2 + $0x3c] sm:$0xf]
        %277 = vset.pattern.permute.xlu0 1
        %278 = vperm.xlu0 %277, %v251
        %v279 = vpop.permute.xlu0 %278
        %vm280 = vcmp.eq.s32.totalorder %v279, %v253
        %v281 = vsel %vm280, 1, 0
        %v282 = vcvt.s32.f32 %v281
        %v283 = vpack.c.bf16 %v282, %v282
        %s284 = scalar_lea.vmem [#allocation2], 64
        %v285 = vld [vmem:[%s284] sm:$0xf]
        %v286 = vld [vmem:[%s284 + $0x4] sm:$0xf]
        %v287 = vld [vmem:[%s284 + $0x8] sm:$0xf]
        %v288 = vld [vmem:[%s284 + $0xc] sm:$0xf]
        %v289 = vld [vmem:[%s284 + $0x10] sm:$0xf]
        %v290 = vld [vmem:[%s284 + $0x14] sm:$0xf]
        %v291 = vld [vmem:[%s284 + $0x18] sm:$0xf]
        %v292 = vld [vmem:[%s284 + $0x1c] sm:$0xf]
        %v293 = vld [vmem:[%s284 + $0x20] sm:$0xf]
        %v294 = vld [vmem:[%s284 + $0x24] sm:$0xf]
        %v295 = vld [vmem:[%s284 + $0x28] sm:$0xf]
        %v296 = vld [vmem:[%s284 + $0x2c] sm:$0xf]
        %v297 = vld [vmem:[%s284 + $0x30] sm:$0xf]
        %v298 = vld [vmem:[%s284 + $0x34] sm:$0xf]
        %v299 = vld [vmem:[%s284 + $0x38] sm:$0xf]
        %v300 = vld [vmem:[%s284 + $0x3c] sm:$0xf]
        %v317 = vunpack.c.l.b16 %v285
        %v318 = vunpack.c.l.b16 %v286
        %v319 = vunpack.c.l.b16 %v287
        %v320 = vunpack.c.l.b16 %v288
        %v321 = vunpack.c.l.b16 %v289
        %v322 = vunpack.c.l.b16 %v290
        %v323 = vunpack.c.l.b16 %v291
        %v324 = vunpack.c.l.b16 %v292
        %v325 = vunpack.c.l.b16 %v293
        %v326 = vunpack.c.l.b16 %v294
        %v327 = vunpack.c.l.b16 %v295
        %v328 = vunpack.c.l.b16 %v296
        %v329 = vunpack.c.l.b16 %v297
        %v330 = vunpack.c.l.b16 %v298
        %v331 = vunpack.c.l.b16 %v299
        %v332 = vunpack.c.l.b16 %v300
        %v333 = vpack.c.b16 %v318, %v317
        %v334 = vpack.c.b16 %v320, %v319
        %v335 = vpack.c.b16 %v322, %v321
        %v336 = vpack.c.b16 %v324, %v323
        %v337 = vpack.c.b16 %v326, %v325
        %v338 = vpack.c.b16 %v328, %v327
        %v339 = vpack.c.b16 %v330, %v329
        %v340 = vpack.c.b16 %v332, %v331
        %349 = vmatprep.subr.bf16.mxu0 0
        %350 = vmatpush1.bf16.msra.mxu0 %v333
        %351 = vmatprep.subr.bf16.mxu0 0
        %352 = vmatpush1.bf16.msra.mxu0 %v334
        %353 = vmatprep.subr.bf16.mxu0 0
        %354 = vmatpush1.bf16.msra.mxu0 %v335
        %355 = vmatprep.subr.bf16.mxu0 0
        %356 = vmatpush1.bf16.msra.mxu0 %v336
        %357 = vmatprep.subr.bf16.mxu0 0
        %358 = vmatpush1.bf16.msra.mxu0 %v337
        %359 = vmatprep.subr.bf16.mxu0 0
        %360 = vmatpush1.bf16.msra.mxu0 %v338
        %361 = vmatprep.subr.bf16.mxu0 0
        %362 = vmatpush1.bf16.msra.mxu0 %v339
        %363 = vmatprep.subr.bf16.mxu0 0
        %364 = vmatpush1.bf16.msra.mxu0 %v340
        %365 = vmatprep.subr.bf16.mxu0 0
        %366 = vmatpush1.bf16.msra.mxu0 0
        %367 = vmatprep.subr.bf16.mxu0 0
        %368 = vmatpush1.bf16.msra.mxu0 0
        %369 = vmatprep.subr.bf16.mxu0 0
        %370 = vmatpush1.bf16.msra.mxu0 0
        %371 = vmatprep.subr.bf16.mxu0 0
        %372 = vmatpush1.bf16.msra.mxu0 0
        %373 = vmatprep.subr.bf16.mxu0 0
        %374 = vmatpush1.bf16.msra.mxu0 0
        %375 = vmatprep.subr.bf16.mxu0 0
        %376 = vmatpush1.bf16.msra.mxu0 0
        %377 = vmatprep.subr.bf16.mxu0 0
        %378 = vmatpush1.bf16.msra.mxu0 0
        %379 = vmatprep.subr.bf16.mxu0 0
        %380 = vmatpush1.bf16.msra.mxu0 0
        %381 = vmatprep.mubr.bf16.mxu0 0
        %382 = vmatmul.mubr.bf16.gmra.mrb[0].mxu0 %v283
        %v383 = vpop.f32.mrb[0].mxu0
        %v384 = vadd.f32 0.0, %v383
        %v385 = vpop.f32.mrb[0].mxu0
        %v386 = vpop.f32.mrb[0].mxu0
        %v387 = vpop.f32.mrb[0].mxu0
        %388 = vdwg.mxu0
        %v405 = vunpack.c.l.b16 %v261
        %v406 = vunpack.c.l.b16 %v262
        %v407 = vunpack.c.l.b16 %v263
        %v408 = vunpack.c.l.b16 %v264
        %v409 = vunpack.c.l.b16 %v265
        %v410 = vunpack.c.l.b16 %v266
        %v411 = vunpack.c.l.b16 %v267
        %v412 = vunpack.c.l.b16 %v268
        %v413 = vunpack.c.l.b16 %v269
        %v414 = vunpack.c.l.b16 %v270
        %v415 = vunpack.c.l.b16 %v271
        %v416 = vunpack.c.l.b16 %v272
        %v417 = vunpack.c.l.b16 %v273
        %v418 = vunpack.c.l.b16 %v274
        %v419 = vunpack.c.l.b16 %v275
        %v420 = vunpack.c.l.b16 %v276
        %v421 = vpack.c.b16 %v406, %v405
        %v422 = vpack.c.b16 %v408, %v407
        %v423 = vpack.c.b16 %v410, %v409
        %v424 = vpack.c.b16 %v412, %v411
        %v425 = vpack.c.b16 %v414, %v413
        %v426 = vpack.c.b16 %v416, %v415
        %v427 = vpack.c.b16 %v418, %v417
        %v428 = vpack.c.b16 %v420, %v419
        %437 = vmatprep.subr.bf16.mxu0 0
        %438 = vmatpush1.bf16.msra.mxu0 %v421
        %439 = vmatprep.subr.bf16.mxu0 0
        %440 = vmatpush1.bf16.msra.mxu0 %v422
        %441 = vmatprep.subr.bf16.mxu0 0
        %442 = vmatpush1.bf16.msra.mxu0 %v423
        %443 = vmatprep.subr.bf16.mxu0 0
        %444 = vmatpush1.bf16.msra.mxu0 %v424
        %445 = vmatprep.subr.bf16.mxu0 0
        %446 = vmatpush1.bf16.msra.mxu0 %v425
        %447 = vmatprep.subr.bf16.mxu0 0
        %448 = vmatpush1.bf16.msra.mxu0 %v426
        %449 = vmatprep.subr.bf16.mxu0 0
        %450 = vmatpush1.bf16.msra.mxu0 %v427
        %451 = vmatprep.subr.bf16.mxu0 0
        %452 = vmatpush1.bf16.msra.mxu0 %v428
        %453 = vmatprep.subr.bf16.mxu0 0
        %454 = vmatpush1.bf16.msra.mxu0 0
        %455 = vmatprep.subr.bf16.mxu0 0
        %456 = vmatpush1.bf16.msra.mxu0 0
        %457 = vmatprep.subr.bf16.mxu0 0
        %458 = vmatpush1.bf16.msra.mxu0 0
        %459 = vmatprep.subr.bf16.mxu0 0
        %460 = vmatpush1.bf16.msra.mxu0 0
        %461 = vmatprep.subr.bf16.mxu0 0
        %462 = vmatpush1.bf16.msra.mxu0 0
        %463 = vmatprep.subr.bf16.mxu0 0
        %464 = vmatpush1.bf16.msra.mxu0 0
        %465 = vmatprep.subr.bf16.mxu0 0
        %466 = vmatpush1.bf16.msra.mxu0 0
        %467 = vmatprep.subr.bf16.mxu0 0
        %468 = vmatpush1.bf16.msra.mxu0 0
        %469 = vmatprep.mubr.bf16.mxu0 0
        %470 = vmatmul.mubr.bf16.gmra.mrb[0].mxu0 %v260
        %v471 = vpop.f32.mrb[0].mxu0
        %v472 = vadd.f32 %v384, %v471
        %v473 = vpop.f32.mrb[0].mxu0
        %v474 = vpop.f32.mrb[0].mxu0
        %v475 = vpop.f32.mrb[0].mxu0
        %476 = vdwg.mxu0
        %v477 = vld [vmem:[%s2] sm:$0x1]
        %v479 = vlaneseq
        %v480 = vshrl.u32 %v479, 7
        %v481 = vsub.s32 0, %v480
        %v482 = vrot.slane %v477, %v481
        %v484 = vadd.f32 %v472, %v482
        %v485 = vmax.f32 %v484, 0.0
        %v486 = vpack.c.bf16 %v485, %v485
        %v487 = vld [vmem:[#allocation5] sm:$0xf]
        %v488 = vld [vmem:[#allocation5 + $0x4] sm:$0xf]
        %v489 = vld [vmem:[#allocation5 + $0x8] sm:$0xf]
        %v490 = vld [vmem:[#allocation5 + $0xc] sm:$0xf]
        %v491 = vld [vmem:[#allocation5 + $0x10] sm:$0xf]
        %v492 = vld [vmem:[#allocation5 + $0x14] sm:$0xf]
        %v493 = vld [vmem:[#allocation5 + $0x18] sm:$0xf]
        %v494 = vld [vmem:[#allocation5 + $0x1c] sm:$0xf]
        %v495 = vld [vmem:[#allocation5 + $0x20] sm:$0xf]
        %v496 = vld [vmem:[#allocation5 + $0x24] sm:$0xf]
        %v497 = vld [vmem:[#allocation5 + $0x28] sm:$0xf]
        %v498 = vld [vmem:[#allocation5 + $0x2c] sm:$0xf]
        %v499 = vld [vmem:[#allocation5 + $0x30] sm:$0xf]
        %v500 = vld [vmem:[#allocation5 + $0x34] sm:$0xf]
        %v501 = vld [vmem:[#allocation5 + $0x38] sm:$0xf]
        %v502 = vld [vmem:[#allocation5 + $0x3c] sm:$0xf]
        %v503 = vld [vmem:[%s4] sm:$0x1]
        %v505 = vlaneseq
        %v506 = vshrl.u32 %v505, 7
        %v507 = vsub.s32 0, %v506
        %v508 = vrot.slane %v503, %v507
        %v526 = vunpack.c.l.b16 %v487
        %v527 = vunpack.c.l.b16 %v488
        %v528 = vunpack.c.l.b16 %v489
        %v529 = vunpack.c.l.b16 %v490
        %v530 = vunpack.c.l.b16 %v491
        %v531 = vunpack.c.l.b16 %v492
        %v532 = vunpack.c.l.b16 %v493
        %v533 = vunpack.c.l.b16 %v494
        %v534 = vunpack.c.l.b16 %v495
        %v535 = vunpack.c.l.b16 %v496
        %v536 = vunpack.c.l.b16 %v497
        %v537 = vunpack.c.l.b16 %v498
        %v538 = vunpack.c.l.b16 %v499
        %v539 = vunpack.c.l.b16 %v500
        %v540 = vunpack.c.l.b16 %v501
        %v541 = vunpack.c.l.b16 %v502
        %v542 = vpack.c.b16 %v527, %v526
        %v543 = vpack.c.b16 %v529, %v528
        %v544 = vpack.c.b16 %v531, %v530
        %v545 = vpack.c.b16 %v533, %v532
        %v546 = vpack.c.b16 %v535, %v534
        %v547 = vpack.c.b16 %v537, %v536
        %v548 = vpack.c.b16 %v539, %v538
        %v549 = vpack.c.b16 %v541, %v540
        %558 = vmatprep.subr.bf16.mxu0 0
        %559 = vmatpush1.bf16.msra.mxu0 %v542
        %560 = vmatprep.subr.bf16.mxu0 0
        %561 = vmatpush1.bf16.msra.mxu0 %v543
        %562 = vmatprep.subr.bf16.mxu0 0
        %563 = vmatpush1.bf16.msra.mxu0 %v544
        %564 = vmatprep.subr.bf16.mxu0 0
        %565 = vmatpush1.bf16.msra.mxu0 %v545
        %566 = vmatprep.subr.bf16.mxu0 0
        %567 = vmatpush1.bf16.msra.mxu0 %v546
        %568 = vmatprep.subr.bf16.mxu0 0
        %569 = vmatpush1.bf16.msra.mxu0 %v547
        %570 = vmatprep.subr.bf16.mxu0 0
        %571 = vmatpush1.bf16.msra.mxu0 %v548
        %572 = vmatprep.subr.bf16.mxu0 0
        %573 = vmatpush1.bf16.msra.mxu0 %v549
        %574 = vmatprep.subr.bf16.mxu0 0
        %575 = vmatpush1.bf16.msra.mxu0 0
        %576 = vmatprep.subr.bf16.mxu0 0
        %577 = vmatpush1.bf16.msra.mxu0 0
        %578 = vmatprep.subr.bf16.mxu0 0
        %579 = vmatpush1.bf16.msra.mxu0 0
        %580 = vmatprep.subr.bf16.mxu0 0
        %581 = vmatpush1.bf16.msra.mxu0 0
        %582 = vmatprep.subr.bf16.mxu0 0
        %583 = vmatpush1.bf16.msra.mxu0 0
        %584 = vmatprep.subr.bf16.mxu0 0
        %585 = vmatpush1.bf16.msra.mxu0 0
        %586 = vmatprep.subr.bf16.mxu0 0
        %587 = vmatpush1.bf16.msra.mxu0 0
        %588 = vmatprep.subr.bf16.mxu0 0
        %589 = vmatpush1.bf16.msra.mxu0 0
        %590 = vmatprep.mubr.bf16.mxu0 0
        %591 = vmatmul.mubr.bf16.gmra.mrb[0].mxu0 %v486
        %v592 = vpop.f32.mrb[0].mxu0
        %v593 = vadd.f32 %v508, %v592
        %v594 = vpop.f32.mrb[0].mxu0
        %v595 = vpop.f32.mrb[0].mxu0
        %v596 = vpop.f32.mrb[0].mxu0
        %597 = vdwg.mxu0
        %598 = vmax.xlane.f32.xlu0 %v593
        %v599 = vpop.xlane.xlu0 %598
        %v600 = vsub.f32 %v593, %v599
        %v601 = vmul.f32 %v600, 1.442695
        %v602 = vpow.pop %v601
        %603 = vadd.xlane.f32.xlu0 %v602
        %v604 = vpop.xlane.xlu0 %603
        %v605 = vlog2.pop %v604
        %v606 = vmul.f32 %v605, 0.6931472
        %v607 = vsub.f32 %v600, %v606
        %608 = vst [vmem:[%s245] sm:$0xff] %v607
        %s609 = sand.u32 %s139, 1
        %s610 = scalar_lea.sflag [#allocation4], %s609
        %s611 = sand.u32 %s139, 1
        %s612 = smul.addr %s611, 8
        %s613 = scalar_lea.vmem [#allocation7], %s612
        // Predicated region
        $region49: #{tpu_custom_call.1} parent=39 // pred_check
          %p614 = pneg %p149
        $region50: #{tpu_custom_call.1} parent=39 // pred_check_branch
          %616 = sbr.rel (%p614) target = $region52
        $region51: #{tpu_custom_call.1} parent=39 // pred_region
          %s618 = ssub.s32 128, 128
          %619 = vsyncadd %s610, %s618
          %s620 = smul.addr %s21, 128
          %s621 = scalar_lea.hbm %s5, %s620
          %s623 = sshll.u32 %s613, 4
          %s624 = int_to_ptr.vmem [resolvable:$true] %s623
          %626 = dma.vmem_to_hbm [thread:$0]  %s624, 128, %s621, %s610
        $region52: #{tpu_custom_call.1} parent=39 // pred_fallthru
          _
      $region40: #{tpu_custom_call.1} parent=5 // pred_fallthru
        _
      %p627 = scmp.le.s32.totalorder 2, %s16
      // Predicated region
      $region53: #{tpu_custom_call.1} parent=5 // pred_check
        %p628 = pneg %p627
      $region54: #{tpu_custom_call.1} parent=5 // pred_check_branch
        %630 = sbr.rel (%p628) target = $region56
      $region55: #{tpu_custom_call.1} parent=5 // pred_region
        %s631 = ssub.s32 %s16, 2
        // Predicated region
        $region57: #{tpu_custom_call.1} parent=55 // pred_check
          %p632 = pneg %p155
        $region58: #{tpu_custom_call.1} parent=55 // pred_check_branch
          %634 = sbr.rel (%p632) target = $region60
        $region59: #{tpu_custom_call.1} parent=55 // pred_region
          %s635 = sand.u32 %s140, 1
          %s636 = scalar_lea.sflag [#allocation4], %s635
          %s637 = sand.u32 %s140, 1
          %s638 = smul.addr %s637, 8
          %s639 = scalar_lea.vmem [#allocation7], %s638
          %640 = dma.done %s636, 128
        $region60: #{tpu_custom_call.1} parent=55 // pred_fallthru
          _
      $region56: #{tpu_custom_call.1} parent=5 // pred_fallthru
        _
    $region6: #{tpu_custom_call.1} parent=1 // loop_footer
      %s20 = sadd.s32 1, %s16
    $region7: #{tpu_custom_call.1} parent=1 // loop_footer_branch
      %15 = sbr.rel target = $region3
    $region8: #{tpu_custom_call.1} parent=1 // loop_exit
      _
    %641 = vsyncpa [#allocation3], 1
    %s642 = scalar_lea.sflag [#allocation3], 1
    %643 = vsyncpa %s642, 1
    %644 = vsyncpa [#allocation6], 1
    %645 = vsyncpa [#allocation4], 1
    %s646 = scalar_lea.sflag [#allocation4], 1
    %647 = vsyncpa %s646, 1

</llo_original>
